<compile_context>
chip_gen: v7x
topology: tpu7x:2x2x1
jax: 0.10.0
libtpu: 0.0.40
codegen_flags: <defaults>
</compile_context>

<pallas_src>
import functools

import jax
import jax.numpy as jnp
from jax.experimental import pallas as pl
from jax.experimental.pallas import tpu as pltpu


def _centering_kernel(x_ref, chan_ref, o_ref, *, n_points: int):
    """x_ref: (TB, N*C) flattened point clouds; chan_ref: (1, N*C) channel ids."""
    x = x_ref[...]                                   # (TB, NC)
    xf = x.astype(jnp.float32)
    chan = chan_ref[...]                             # (1, NC) int32, chan[k] = k % C

    inv_n = jnp.float32(1.0 / n_points)

    # Per-batch xyz sums: three masked full-lane reductions (select, not a
    # multiply-by-mask, so inf/NaN feature channels can never poison the
    # xyz centroid).
    sels = [chan == c for c in range(3)]             # 3 x (1, NC) bool
    means = [
        jnp.sum(jnp.where(sel, xf, 0.0), axis=-1, keepdims=True) * inv_n
        for sel in sels
    ]                                                # 3 x (TB, 1) f32

    # Broadcast the centroid back onto the flattened layout.  Feature channel
    # positions get an exact 0.0, so (x - mean_flat) passes them through
    # bit-exactly.
    mean_flat = jnp.where(
        sels[0], means[0],
        jnp.where(sels[1], means[1],
                  jnp.where(sels[2], means[2], jnp.float32(0.0))))

    o_ref[...] = (xf - mean_flat).astype(o_ref.dtype)


def _choose_batch_tile(batch: int, row_elems: int, itemsize: int) -> int:
    """Pick how many batch rows (point clouds) to process per grid step.

    Budget: double-buffered input + output blocks (~4 * tb * row_bytes) kept
    well under the scoped-VMEM defaults on every generation
    (v5e: 16 MiB, v6e/v7x: 32 MiB).
    """
    budget_bytes = 8 * 1024 * 1024
    row_bytes = max(1, row_elems * itemsize)
    max_tb = max(1, budget_bytes // (4 * row_bytes))
    if batch <= max_tb and batch < 16:
        # Small batch: one block spanning the whole batch (block dims then
        # equal the full array dims, which always satisfies layout rules).
        return batch
    if max_tb < 8:
        # TODO(synk): for very large per-batch clouds a two-pass kernel
        # (per-batch sums, then a freely tiled subtract fed via scalar
        # prefetch) would avoid keeping a whole flattened cloud resident per
        # row; not needed at typical point-cloud sizes.
        return 1
    # Keep the sublane dim a multiple of 8 and expose at least two grid steps
    # so v7x's dual TensorCores both get work and DMA/compute can pipeline.
    tb = min(max_tb, max(8, batch // 2))
    return max(8, (tb // 8) * 8)


@jax.jit
def pointcloud_centering(points: jax.Array) -> jax.Array:
    """points: (B, N, C) float array with C >= 3. Returns centered points."""
    B, N, C = points.shape
    if C < 3:
        raise ValueError(f"need at least 3 channels (xyz), got C={C}")
    NC = N * C
    flat = points.reshape(B, NC)                     # free: contiguous dims

    tb = _choose_batch_tile(B, NC, flat.dtype.itemsize)
    grid = (pl.cdiv(B, tb),)

    # Channel id of each flattened position; tiny, computed once outside the
    # kernel, and its block index never changes so the pipeline fetches it once.
    chan = (jnp.arange(NC, dtype=jnp.int32) % C).reshape(1, NC)

    out_flat = pl.pallas_call(
        functools.partial(_centering_kernel, n_points=N),
        out_shape=jax.ShapeDtypeStruct((B, NC), points.dtype),
        grid=grid,
        in_specs=[
            pl.BlockSpec((tb, NC), lambda i: (i, 0)),
            pl.BlockSpec((1, NC), lambda i: (0, 0)),
        ],
        out_specs=pl.BlockSpec((tb, NC), lambda i: (i, 0)),
        input_output_aliases={0: 0},                 # in-place, like PyTorch
        compiler_params=pltpu.CompilerParams(
            dimension_semantics=("parallel",),
            vmem_limit_bytes=32 * 1024 * 1024,
        ),
    )(flat, chan)

    return out_flat.reshape(B, N, C)


def _reference(points: jax.Array) -> jax.Array:
    xyz = points[:, :, :3]
    centered = xyz - jnp.mean(xyz, axis=-2, keepdims=True)
    return jnp.concatenate([centered, points[:, :, 3:]], axis=-1)


if __name__ == "__main__":
    key = jax.random.PRNGKey(0)
    B, N, C = 2, 16, 4  # small point cloud: 16 points, xyz + 1 feature channel
    points = jax.random.normal(key, (B, N, C), dtype=jnp.float32)

    ref = _reference(points)           # computed before the (aliased) kernel call

    out = pointcloud_centering(points)
    out = jax.block_until_ready(out)

    assert out.shape == points.shape and out.dtype == points.dtype
    assert jnp.allclose(out, ref, atol=1e-5, rtol=1e-5), "mismatch vs reference"

    print("KERNEL_OK")
</pallas_src>

<mosaic_0001>
module attributes {stable_mosaic.version = 11 : i64} {
  func.func @_centering_kernel(%arg0: i32, %arg1: memref<2x64xf32, #tpu.memory_space<vmem>>, %arg2: memref<1x64xi32, #tpu.memory_space<vmem>>, %arg3: memref<2x64xf32, #tpu.memory_space<vmem>>) attributes {dimension_semantics = [#tpu.dimension_semantics<parallel>], iteration_bounds = array<i64: 1>, scalar_prefetch = 0 : i64, scratch_operands = 0 : i64, tpu.core_type = #tpu.core_type<tc>, window_params = [{transform_indices = @transform_0, window_bounds = array<i64: 2, 64>}, {pipeline_mode = #tpu.pipeline_mode<synchronous>, transform_indices = @transform_1, window_bounds = array<i64: 1, 64>}, {transform_indices = @transform_2, window_bounds = array<i64: 2, 64>}]} {
    %c0 = arith.constant 0 : index
    %c0_0 = arith.constant 0 : index
    %0 = vector.load %arg1[%c0, %c0_0] : memref<2x64xf32, #tpu.memory_space<vmem>>, vector<2x64xf32>
    %c0_1 = arith.constant 0 : index
    %c0_2 = arith.constant 0 : index
    %1 = vector.load %arg2[%c0_1, %c0_2] : memref<1x64xi32, #tpu.memory_space<vmem>>, vector<1x64xi32>
    %c0_i32 = arith.constant 0 : i32
    %2 = vector.broadcast %c0_i32 : i32 to vector<1x64xi32>
    %3 = arith.cmpi eq, %1, %2 : vector<1x64xi32>
    %c1_i32 = arith.constant 1 : i32
    %4 = vector.broadcast %c1_i32 : i32 to vector<1x64xi32>
    %5 = arith.cmpi eq, %1, %4 : vector<1x64xi32>
    %c2_i32 = arith.constant 2 : i32
    %6 = vector.broadcast %c2_i32 : i32 to vector<1x64xi32>
    %7 = arith.cmpi eq, %1, %6 : vector<1x64xi32>
    %cst = arith.constant 0.000000e+00 : f32
    %8 = vector.shape_cast %3 : vector<1x64xi1> to vector<1x64xi1>
    %9 = vector.broadcast %8 : vector<1x64xi1> to vector<2x64xi1>
    %10 = vector.broadcast %cst : f32 to vector<2x64xf32>
    %11 = arith.select %9, %0, %10 : vector<2x64xi1>, vector<2x64xf32>
    %cst_3 = arith.constant dense<0.000000e+00> : vector<2xf32>
    %12 = vector.multi_reduction <add>, %11, %cst_3 [1] : vector<2x64xf32> to vector<2xf32>
    %13 = vector.shape_cast %12 : vector<2xf32> to vector<2x1xf32>
    %cst_4 = arith.constant 6.250000e-02 : f32
    %14 = vector.broadcast %cst_4 : f32 to vector<2x1xf32>
    %15 = arith.mulf %13, %14 : vector<2x1xf32>
    %cst_5 = arith.constant 0.000000e+00 : f32
    %16 = vector.shape_cast %5 : vector<1x64xi1> to vector<1x64xi1>
    %17 = vector.broadcast %16 : vector<1x64xi1> to vector<2x64xi1>
    %18 = vector.broadcast %cst_5 : f32 to vector<2x64xf32>
    %19 = arith.select %17, %0, %18 : vector<2x64xi1>, vector<2x64xf32>
    %cst_6 = arith.constant dense<0.000000e+00> : vector<2xf32>
    %20 = vector.multi_reduction <add>, %19, %cst_6 [1] : vector<2x64xf32> to vector<2xf32>
    %21 = vector.shape_cast %20 : vector<2xf32> to vector<2x1xf32>
    %cst_7 = arith.constant 6.250000e-02 : f32
    %22 = vector.broadcast %cst_7 : f32 to vector<2x1xf32>
    %23 = arith.mulf %21, %22 : vector<2x1xf32>
    %cst_8 = arith.constant 0.000000e+00 : f32
    %24 = vector.shape_cast %7 : vector<1x64xi1> to vector<1x64xi1>
    %25 = vector.broadcast %24 : vector<1x64xi1> to vector<2x64xi1>
    %26 = vector.broadcast %cst_8 : f32 to vector<2x64xf32>
    %27 = arith.select %25, %0, %26 : vector<2x64xi1>, vector<2x64xf32>
    %cst_9 = arith.constant dense<0.000000e+00> : vector<2xf32>
    %28 = vector.multi_reduction <add>, %27, %cst_9 [1] : vector<2x64xf32> to vector<2xf32>
    %29 = vector.shape_cast %28 : vector<2xf32> to vector<2x1xf32>
    %cst_10 = arith.constant 6.250000e-02 : f32
    %30 = vector.broadcast %cst_10 : f32 to vector<2x1xf32>
    %31 = arith.mulf %29, %30 : vector<2x1xf32>
    %cst_11 = arith.constant 0.000000e+00 : f32
    %32 = vector.shape_cast %7 : vector<1x64xi1> to vector<1x64xi1>
    %33 = vector.broadcast %32 : vector<1x64xi1> to vector<2x64xi1>
    %34 = vector.shape_cast %31 : vector<2x1xf32> to vector<2x1xf32>
    %35 = vector.broadcast %34 : vector<2x1xf32> to vector<2x64xf32>
    %36 = vector.broadcast %cst_11 : f32 to vector<2x64xf32>
    %37 = arith.select %33, %35, %36 : vector<2x64xi1>, vector<2x64xf32>
    %38 = vector.shape_cast %5 : vector<1x64xi1> to vector<1x64xi1>
    %39 = vector.broadcast %38 : vector<1x64xi1> to vector<2x64xi1>
    %40 = vector.shape_cast %23 : vector<2x1xf32> to vector<2x1xf32>
    %41 = vector.broadcast %40 : vector<2x1xf32> to vector<2x64xf32>
    %42 = arith.select %39, %41, %37 : vector<2x64xi1>, vector<2x64xf32>
    %43 = vector.shape_cast %3 : vector<1x64xi1> to vector<1x64xi1>
    %44 = vector.broadcast %43 : vector<1x64xi1> to vector<2x64xi1>
    %45 = vector.shape_cast %15 : vector<2x1xf32> to vector<2x1xf32>
    %46 = vector.broadcast %45 : vector<2x1xf32> to vector<2x64xf32>
    %47 = arith.select %44, %46, %42 : vector<2x64xi1>, vector<2x64xf32>
    %48 = arith.subf %0, %47 : vector<2x64xf32>
    %c0_12 = arith.constant 0 : index
    %c0_13 = arith.constant 0 : index
    %49 = vector.load %arg3[%c0_12, %c0_13] : memref<2x64xf32, #tpu.memory_space<vmem>>, vector<2x64xf32>
    tpu.vector_store %arg3[%c0_12, %c0_13], %48 {strides = array<i32>} : memref<2x64xf32, #tpu.memory_space<vmem>>, vector<2x64xf32>,
    return
  }
  func.func @transform_0(%arg0: i32) -> (i32, i32) {
    %c0_i32 = arith.constant 0 : i32
    %c0_i32_0 = arith.constant 0 : i32
    return %arg0, %c0_i32 : i32, i32
  }
  func.func @transform_1(%arg0: i32) -> (i32, i32) {
    %c0_i32 = arith.constant 0 : i32
    %c0_i32_0 = arith.constant 0 : i32
    %c0_i32_1 = arith.constant 0 : i32
    return %c0_i32, %c0_i32_0 : i32, i32
  }
  func.func @transform_2(%arg0: i32) -> (i32, i32) {
    %c0_i32 = arith.constant 0 : i32
    %c0_i32_0 = arith.constant 0 : i32
    return %arg0, %c0_i32 : i32, i32
  }
}

</mosaic_0001>

<llo_original>
// kernel: pointcloud_centering.1
$region0: #{pointcloud_centering.1}
  #allocation0 [shape = 'u32[]', space=smem, size = 0x4, offset = 0x4, fixed_abs, tag = 'smem constant byte address 0x4 - core index']
  #allocation1 [shape = 'u32[144,128]{1,0:T(1,128)}', space=vmem, size = 0x12000, scoped, tag = 'internal scratch']
  %s0 = inlined_call_operand.vmem [shape: f32[2,64], index: 0, kind: input, shape index: {}, may-alias: {0,2}]
  %s1 = inlined_call_operand.vmem [shape: s32[1,64], index: 1, kind: input, shape index: {}]
  %s2 = inlined_call_operand.vmem [shape: f32[2,64], index: 2, kind: output, shape index: {}, may-alias: {0,2}]
  %s3 = sld [smem:[#allocation0]]
  $region18: #{pointcloud_centering.1} parent=0
    _
  %s5 = ssub.s32 1, %s3
  %s6 = scalar_select 0, %s5, %s3
  // Predicated region
  $region2: #{pointcloud_centering.1} parent=0 // pred_check
    _
  $region3: #{pointcloud_centering.1} parent=0 // pred_check_branch
    %8 = sbr.rel (0) target = $region5
  $region4: #{pointcloud_centering.1} parent=0 // pred_region
    _
  $region5: #{pointcloud_centering.1} parent=0 // pred_fallthru
    _
  // Predicated region
  $region6: #{pointcloud_centering.1} parent=0 // pred_check
    _
  $region7: #{pointcloud_centering.1} parent=0 // pred_check_branch
    %10 = sbr.rel (0) target = $region9
  $region8: #{pointcloud_centering.1} parent=0 // pred_region
    _
  $region9: #{pointcloud_centering.1} parent=0 // pred_fallthru
    _
  %v11 = vld [vmem:[%s0] sm:$0x3]
  %v12 = vld [vmem:[%s1] sm:$0x1]
  %vm13 = vcmp.eq.s32.totalorder %v12, 0
  %vm14 = vcmp.eq.s32.totalorder %v12, 1
  %vm15 = vcmp.eq.s32.totalorder %v12, 2
  %v16 = vsel %vm13, 1, 0
  %v17 = vlaneseq
  %v18 = vshrl.u32 %v17, 7
  %v19 = vsub.s32 0, %v18
  %v20 = vrot.slane %v16, %v19
  %vm21 = vcmp.eq.s32.totalorder %v20, 1
  %v22 = vsel %vm21, %v11, 0.0
  %vm23 = vcmask 517120
  %v24 = vsel %vm23, %v22, 0.0
  %25 = vadd.xlane.f32.xlu0 %v24
  %v26 = vpop.xlane.xlu0 %25
  %v27 = vmul.f32 %v26, 0.0625
  %v28 = vsel %vm14, 1, 0
  %v29 = vlaneseq
  %v30 = vshrl.u32 %v29, 7
  %v31 = vsub.s32 0, %v30
  %v32 = vrot.slane %v28, %v31
  %vm33 = vcmp.eq.s32.totalorder %v32, 1
  %v34 = vsel %vm33, %v11, 0.0
  %v35 = vsel %vm23, %v34, 0.0
  %36 = vadd.xlane.f32.xlu0 %v35
  %v37 = vpop.xlane.xlu0 %36
  %v38 = vmul.f32 %v37, 0.0625
  %v39 = vsel %vm15, 1, 0
  %v40 = vlaneseq
  %v41 = vshrl.u32 %v40, 7
  %v42 = vsub.s32 0, %v41
  %v43 = vrot.slane %v39, %v42
  %vm44 = vcmp.eq.s32.totalorder %v43, 1
  %v45 = vsel %vm44, %v11, 0.0
  %v46 = vsel %vm23, %v45, 0.0
  %47 = vadd.xlane.f32.xlu0 %v46
  %v48 = vpop.xlane.xlu0 %47
  %v49 = vmul.f32 %v48, 0.0625
  %v50 = vsel %vm44, %v49, 0.0
  %v51 = vsel %vm33, %v38, %v50
  %v52 = vsel %vm21, %v27, %v51
  %v53 = vsub.f32 %v11, %v52
  %54 = vst.msk [vmem:[%s2] sm:$0x3] %vm23, %v53
  // Predicated region
  $region10: #{pointcloud_centering.1} parent=0 // pred_check
    _
  $region11: #{pointcloud_centering.1} parent=0 // pred_check_branch
    %56 = sbr.rel (0) target = $region13
  $region12: #{pointcloud_centering.1} parent=0 // pred_region
    _
  $region13: #{pointcloud_centering.1} parent=0 // pred_fallthru
    _
  // Predicated region
  $region14: #{pointcloud_centering.1} parent=0 // pred_check
    _
  $region15: #{pointcloud_centering.1} parent=0 // pred_check_branch
    %58 = sbr.rel (0) target = $region17
  $region16: #{pointcloud_centering.1} parent=0 // pred_region
    _
  $region17: #{pointcloud_centering.1} parent=0 // pred_fallthru
    _

</llo_original>
